<compile_context>
chip_gen: v7x
topology: tpu7x:2x2x1
jax: 0.10.0
libtpu: 0.0.40
codegen_flags: <defaults>
</compile_context>

<pallas_src>
import functools

import numpy as np
import jax
import jax.numpy as jnp
from jax import lax
from jax.experimental import pallas as pl
from jax.experimental.pallas import tpu as pltpu


# murmur3-style 32-bit mixing constants, pre-wrapped to int32 two's complement.
_C1 = np.int32(-1640531535)   # 0x9E3779B1
_C2 = np.int32(-2048144789)   # 0x85EBCA6B
_C3 = np.int32(-1028477387)   # 0xC2B2AE35


def _mix32(h):
    h = h ^ lax.shift_right_logical(h, jnp.int32(16))
    h = h * _C2
    h = h ^ lax.shift_right_logical(h, jnp.int32(13))
    h = h * _C3
    h = h ^ lax.shift_right_logical(h, jnp.int32(16))
    return h


def _pe_dropout_kernel(seed_ref, x_ref, pe_ref, o_ref, *,
                       dropout_p, tile_r, tile_c, n_cols):
    # x_ref: (tR, tC), pe_ref: (1, tC) -> broadcasts over the sublane (row) axis.
    val = x_ref[...] + pe_ref[...]

    if dropout_p > 0.0:
        # Stateless counter-based hash of (seed, global element index) -> keep mask.
        r = lax.broadcasted_iota(jnp.int32, (tile_r, tile_c), 0)
        c = lax.broadcasted_iota(jnp.int32, (tile_r, tile_c), 1)
        g_row = pl.program_id(0) * tile_r + r
        g_col = pl.program_id(1) * tile_c + c
        # NOTE: int32 index wraps for extremely large tensors; fine for hashing.
        idx = g_row * jnp.int32(n_cols) + g_col
        h = idx * _C1 + seed_ref[0]
        h = _mix32(h)
        bits24 = h & jnp.int32(0x00FFFFFF)                 # uniform in [0, 2^24)
        thresh = jnp.int32(int(round(dropout_p * float(1 << 24))))
        scale = jnp.float32(1.0 / (1.0 - dropout_p))
        val = val * jnp.where(bits24 >= thresh, scale, jnp.float32(0.0))

    o_ref[...] = val.astype(o_ref.dtype)


def positional_encoding_forward(x, pe, seed, dropout_p=0.1):
    """x: [B, S, E] float32, pe: [S, E] float32, seed: int32 array of shape [1]."""
    B, S, E = x.shape
    assert pe.shape == (S, E)

    R, C = B, S * E
    x2 = x.reshape(R, C)          # lane-dense 2-D view (layout plumbing only)
    pe2 = pe.reshape(1, C)        # shared across the batch rows

    # ---- tile selection: biggest lane-dense blocks under ~4 MiB per block ----
    itemsize = 4
    target_block_bytes = 4 * 1024 * 1024
    if C * itemsize <= target_block_bytes:
        tC = C                                              # full row fits in one block
    else:
        tC = max(128, (target_block_bytes // itemsize) // 128 * 128)
    tR = min(R, max(1, target_block_bytes // (tC * itemsize)))
    if tR < R:
        tR = max(8, (tR // 8) * 8)                          # (8,128) block rule
        if tR >= R:
            tR = R
    grid = (pl.cdiv(R, tR), pl.cdiv(C, tC))

    kernel = functools.partial(
        _pe_dropout_kernel,
        dropout_p=float(dropout_p), tile_r=tR, tile_c=tC, n_cols=C,
    )

    grid_spec = pltpu.PrefetchScalarGridSpec(
        num_scalar_prefetch=1,                               # seed -> SMEM
        grid=grid,
        in_specs=[
            pl.BlockSpec((tR, tC), lambda i, j, seed: (i, j)),   # x rows
            pl.BlockSpec((1, tC), lambda i, j, seed: (0, j)),    # pe (resident, shared)
        ],
        out_specs=pl.BlockSpec((tR, tC), lambda i, j, seed: (i, j)),
    )

    out2 = pl.pallas_call(
        kernel,
        grid_spec=grid_spec,
        out_shape=jax.ShapeDtypeStruct((R, C), x.dtype),
        compiler_params=pltpu.CompilerParams(
            dimension_semantics=("parallel", "parallel"),    # fully parallel / megacore
            vmem_limit_bytes=48 * 1024 * 1024,
        ),
    )(seed, x2, pe2)

    return out2.reshape(B, S, E)


# ----------------------------------------------------------------------------
# Parameter setup (plain JAX glue): sinusoidal table exactly as PyTorch __init__.
# ----------------------------------------------------------------------------
def make_positional_encoding(pad_size, embed):
    pos = jnp.arange(pad_size, dtype=jnp.float32)[:, None]            # [S, 1]
    i = jnp.arange(embed, dtype=jnp.float32)[None, :]                 # [1, E]
    denom = jnp.power(10000.0, (jnp.floor(i / 2.0) * 2.0) / embed)    # (i//2)*2/embed
    pe = pos / denom                                                  # [S, E]
    even = jnp.sin(pe[:, 0::2])
    odd = jnp.cos(pe[:, 1::2])
    pe = pe.at[:, 0::2].set(even).at[:, 1::2].set(odd)
    return pe.astype(jnp.float32)


if __name__ == "__main__":
    # Small shapes consistent with the module: (batch, pad_size, embed)
    B, S, E = 2, 8, 32
    dropout_p = 0.1

    key = jax.random.PRNGKey(0)
    x = jax.random.normal(key, (B, S, E), dtype=jnp.float32)
    pe = make_positional_encoding(S, E)
    seed = jnp.array([0], dtype=jnp.int32)

    # 1) Deterministic check with dropout disabled: kernel must equal x + pe.
    out_nodrop = positional_encoding_forward(x, pe, seed, dropout_p=0.0)
    jax.block_until_ready(out_nodrop)
    ref = x + pe[None, :, :]
    assert jnp.allclose(out_nodrop, ref, atol=1e-6), "mismatch vs reference x + pe"

    # 2) Training-mode forward with dropout: every element is either 0 (dropped)
    #    or (x + pe) / (1 - p) (kept, inverted-dropout scaling).
    out = positional_encoding_forward(x, pe, seed, dropout_p=dropout_p)
    jax.block_until_ready(out)
    assert out.shape == (B, S, E)
    scale = 1.0 / (1.0 - dropout_p)
    kept = out != 0.0
    expect = jnp.where(kept, ref * scale, 0.0)
    assert jnp.allclose(out, expect, atol=1e-5), "dropout output inconsistent"

    print("KERNEL_OK")
</pallas_src>

<mosaic_0001>
module attributes {stable_mosaic.version = 11 : i64} {
  func.func @_pe_dropout_kernel(%arg0: i32, %arg1: i32, %arg2: memref<1xi32, #tpu.memory_space<smem>>, %arg3: memref<2x256xf32, #tpu.memory_space<vmem>>, %arg4: memref<1x256xf32, #tpu.memory_space<vmem>>, %arg5: memref<2x256xf32, #tpu.memory_space<vmem>>) attributes {dimension_semantics = [#tpu.dimension_semantics<parallel>, #tpu.dimension_semantics<parallel>], iteration_bounds = array<i64: 1, 1>, scalar_prefetch = 1 : i64, scratch_operands = 0 : i64, tpu.core_type = #tpu.core_type<tc>, window_params = [{transform_indices = @transform_0, window_bounds = array<i64: 2, 256>}, {transform_indices = @transform_1, window_bounds = array<i64: 1, 256>}, {transform_indices = @transform_2, window_bounds = array<i64: 2, 256>}]} {
    %c0 = arith.constant 0 : index
    %c0_0 = arith.constant 0 : index
    %0 = vector.load %arg3[%c0, %c0_0] : memref<2x256xf32, #tpu.memory_space<vmem>>, vector<2x256xf32>
    %c0_1 = arith.constant 0 : index
    %c0_2 = arith.constant 0 : index
    %1 = vector.load %arg4[%c0_1, %c0_2] : memref<1x256xf32, #tpu.memory_space<vmem>>, vector<1x256xf32>
    %2 = vector.broadcast %1 : vector<1x256xf32> to vector<2x256xf32>
    %3 = arith.addf %0, %2 : vector<2x256xf32>
    %c0_3 = arith.constant 0 : index
    %c0_4 = arith.constant 0 : index
    %4 = vector.load %arg5[%c0_3, %c0_4] : memref<2x256xf32, #tpu.memory_space<vmem>>, vector<2x256xf32>
    tpu.vector_store %arg5[%c0_3, %c0_4], %3 {strides = array<i32>} : memref<2x256xf32, #tpu.memory_space<vmem>>, vector<2x256xf32>,
    return
  }
  func.func @transform_0(%arg0: i32, %arg1: i32, %arg2: memref<1xi32, #tpu.memory_space<smem>>) -> (i32, i32) {
    %c0_i32 = arith.constant 0 : i32
    return %arg0, %arg1 : i32, i32
  }
  func.func @transform_1(%arg0: i32, %arg1: i32, %arg2: memref<1xi32, #tpu.memory_space<smem>>) -> (i32, i32) {
    %c0_i32 = arith.constant 0 : i32
    %c0_i32_0 = arith.constant 0 : i32
    return %c0_i32, %arg1 : i32, i32
  }
  func.func @transform_2(%arg0: i32, %arg1: i32, %arg2: memref<1xi32, #tpu.memory_space<smem>>) -> (i32, i32) {
    %c0_i32 = arith.constant 0 : i32
    return %arg0, %arg1 : i32, i32
  }
}

</mosaic_0001>

<llo_original>
// kernel: tpu_custom_call.1
$region0: #{tpu_custom_call.1}
  #allocation0 [shape = 'u32[]', space=smem, size = 0x4, offset = 0x4, fixed_abs, tag = 'smem constant byte address 0x4 - core index']
  #allocation1 [shape = 'u32[144,128]{1,0:T(1,128)}', space=vmem, size = 0x12000, scoped, tag = 'internal scratch']
  #allocation2 [shape = 's32[1]{0}', space=sflag, size = 0x4, scoped, tag = 'scoped memory for tpu_custom_call.1']
  #allocation3 [shape = 's32[1]{0:T(128)S(6)}', space=smem, size = 0x200, scoped, tag = 'prefetched SMEM operand 0']
  %s0 = inlined_call_operand.<no memory space> [shape: s32[1], index: 0, kind: input, shape index: {}]
  %s1 = inlined_call_operand.hbm [shape: f32[2,256], index: 1, kind: input, shape index: {}]
  %s2 = inlined_call_operand.vmem [shape: f32[1,256], index: 2, kind: input, shape index: {}]
  %s3 = inlined_call_operand.hbm [shape: f32[2,256], index: 3, kind: output, shape index: {}]
  %s4 = sld [smem:[#allocation0]]
  $region22: #{tpu_custom_call.1} parent=0
    _
  %s6 = ssub.s32 1, %s4
  %s7 = scalar_select 0, %s6, %s4
  %8 = sst [smem:[#allocation3]] %s0
  $region1: #{tpu_custom_call.1} parent=0
    #allocation4 [shape = 'u8[2048]{0}', space=vmem, size = 0x800, scoped, tag = 'input window, operand 1, single buffered']
    #allocation5 [shape = 's32[1]{0}', space=sflag, size = 0x4, scoped, tag = 'scoped memory for tpu_custom_call.1']
    #allocation6 [shape = 's32[1]{0}', space=sflag, size = 0x4, scoped, tag = 'scoped memory for tpu_custom_call.1']
    #allocation7 [shape = 'u8[2048]{0}', space=vmem, size = 0x800, scoped, tag = 'output window, operand 0, single buffered']
    %9 = vsyncpa [#allocation5], 0
    %10 = vsyncpa [#allocation6], 0
    // Predicated region
    $region2: #{tpu_custom_call.1} parent=1 // pred_check
      _
    $region3: #{tpu_custom_call.1} parent=1 // pred_check_branch
      %12 = sbr.rel (0) target = $region5
    $region4: #{tpu_custom_call.1} parent=1 // pred_region
      %s14 = ssub.s32 64, 64
      %15 = vsyncadd [#allocation5], %s14
      %s17 = sshll.u32 [#allocation4], 4
      %s18 = int_to_ptr.vmem [resolvable:$true] %s17
      %20 = dma.hbm_to_vmem [thread:$0]  %s1, 64, %s18, [#allocation5]
    $region5: #{tpu_custom_call.1} parent=1 // pred_fallthru
      _
    // Predicated region
    $region6: #{tpu_custom_call.1} parent=1 // pred_check
      _
    $region7: #{tpu_custom_call.1} parent=1 // pred_check_branch
      %22 = sbr.rel (0) target = $region9
    $region8: #{tpu_custom_call.1} parent=1 // pred_region
      _
    $region9: #{tpu_custom_call.1} parent=1 // pred_fallthru
      _
    // Predicated region
    $region10: #{tpu_custom_call.1} parent=1 // pred_check
      _
    $region11: #{tpu_custom_call.1} parent=1 // pred_check_branch
      %24 = sbr.rel (0) target = $region13
    $region12: #{tpu_custom_call.1} parent=1 // pred_region
      %25 = dma.done [#allocation5], 64
    $region13: #{tpu_custom_call.1} parent=1 // pred_fallthru
      _
    %v26 = vld [vmem:[#allocation4] sm:$0xf]
    %v27 = vld [vmem:[%s2] sm:$0x3]
    %v29 = vlaneseq
    %v30 = vshrl.u32 %v29, 7
    %v31 = vsub.s32 0, %v30
    %v32 = vrot.slane %v27, %v31
    %v33 = vlaneseq
    %v34 = vshrl.u32 %v33, 7
    %v35 = vsub.s32 1, %v34
    %v36 = vrot.slane %v27, %v35
    %v37 = vcombine.low %v32, %v36
    %v39 = vunpack.c.l.s4 1983009808
    %v40 = vunpack.c.0.s8 %v39
    %v41 = vlaneseq
    %v42 = vshrl.u32 %v41, 7
    %v43 = vsub.s32 %v40, %v42
    %v44 = vrot.slane %v37, %v43
    %v46 = vadd.f32 %v26, %v44
    %47 = vst [vmem:[#allocation7] sm:$0xf] %v46
    // Predicated region
    $region14: #{tpu_custom_call.1} parent=1 // pred_check
      _
    $region15: #{tpu_custom_call.1} parent=1 // pred_check_branch
      %49 = sbr.rel (0) target = $region17
    $region16: #{tpu_custom_call.1} parent=1 // pred_region
      %s51 = ssub.s32 64, 64
      %52 = vsyncadd [#allocation6], %s51
      %s54 = sshll.u32 [#allocation7], 4
      %s55 = int_to_ptr.vmem [resolvable:$true] %s54
      %57 = dma.vmem_to_hbm [thread:$0]  %s55, 64, %s3, [#allocation6]
    $region17: #{tpu_custom_call.1} parent=1 // pred_fallthru
      _
    // Predicated region
    $region18: #{tpu_custom_call.1} parent=1 // pred_check
      _
    $region19: #{tpu_custom_call.1} parent=1 // pred_check_branch
      %59 = sbr.rel (0) target = $region21
    $region20: #{tpu_custom_call.1} parent=1 // pred_region
      %60 = dma.done [#allocation6], 64
    $region21: #{tpu_custom_call.1} parent=1 // pred_fallthru
      _
    %61 = vsyncpa [#allocation5], 1
    %62 = vsyncpa [#allocation6], 1

</llo_original>
